<compile_context>
chip_gen: v6e
topology: v6e:2x2x1
jax: 0.10.0
libtpu: 0.0.40
codegen_flags: <defaults>
</compile_context>

<pallas_src>
import jax
import jax.numpy as jnp
from jax.experimental import pallas as pl
from jax.experimental.pallas import tpu as pltpu


# Whole-weight residency is used when the bf16 W.T slab is at most this big.
# 8 MiB == dims = 2048 at bf16; the double-buffer allocation (16 MiB) plus
# x/out tiles stays under ~28 MiB, safe even on v7x (64 MiB physical per TC).
_RESIDENT_WEIGHT_MAX_BYTES = 8 * 1024 * 1024
# The fused head-split path keeps the full K (=dims) extent in one x block.
_FUSED_MAX_DIMS = 4096


def _pick_tile(dim, target, aligns):
    """Largest tile <= target that divides `dim` and is a multiple of one of
    `aligns` (tried in order); falls back to the full dimension."""
    if dim <= target:
        return dim
    for align in aligns:
        t = (target // align) * align
        while t >= align:
            if dim % t == 0:
                return t
            t -= align
    return dim


def _vmem_limit(est_bytes):
    """Scoped-VMEM limit: headroom over the estimated footprint, at least the
    32 MiB v6e/v7x default, capped well below any generation's physical VMEM
    for the shapes the gates above allow."""
    return int(min(100 * 1024 * 1024, max(32 * 1024 * 1024, est_bytes * 5 // 4)))


# ----------------------------- kernel bodies ------------------------------ #

def _proj_direct_kernel(x_ref, wt_ref, b_ref, o_ref):
    """o = x @ W.T + b for one tile; single K step, no accumulator needed."""
    o_ref[...] = (jnp.dot(x_ref[...], wt_ref[...],
                          preferred_element_type=jnp.float32)
                  + b_ref[...]).astype(o_ref.dtype)


def _proj_acc_kernel(x_ref, wt_ref, b_ref, o_ref, acc_ref):
    """K-tiled GEMM: f32 accumulation, bias + cast on the last K step."""
    k = pl.program_id(2)

    @pl.when(k == 0)
    def _():
        acc_ref[...] = jnp.zeros_like(acc_ref)

    acc_ref[...] += jnp.dot(x_ref[...], wt_ref[...],
                            preferred_element_type=jnp.float32)

    @pl.when(k == pl.num_programs(2) - 1)
    def _():
        o_ref[...] = (acc_ref[...] + b_ref[...]).astype(o_ref.dtype)


def _make_heads_kernel(heads, head_dim):
    """Full-width GEMM against the VMEM-resident weight, then per-head
    lane-dense (multiple-of-128) stores straight into [B, H, S, Hd]."""
    def kernel(x_ref, wt_ref, b_ref, o_ref):
        # x_ref: (1, ts, D)   wt_ref: (D, N) resident   b_ref: (1, N)
        # o_ref: (1, H, ts, Hd)
        y = (jnp.dot(x_ref[0], wt_ref[...],
                     preferred_element_type=jnp.float32)
             + b_ref[...]).astype(o_ref.dtype)
        for h in range(heads):                      # static unroll over heads
            o_ref[0, h] = y[:, h * head_dim:(h + 1) * head_dim]
    return kernel


# ----------------------------- pallas_call wrappers ------------------------ #

def value_projection_flat(x_flat, w_t, bias2d, out_dtype):
    """y = x @ W.T + b.  x_flat [M, D] bf16, w_t [D, N] bf16, bias2d [1, N] f32."""
    M, D = x_flat.shape
    _, N = w_t.shape
    out_isz = jnp.dtype(out_dtype).itemsize
    w_bytes = D * N * w_t.dtype.itemsize
    flops = 2 * M * D * N
    io_bytes = (x_flat.size * x_flat.dtype.itemsize + w_bytes
                + N * 4 + M * N * out_isz)
    cost = pl.CostEstimate(flops=flops, transcendentals=0,
                           bytes_accessed=io_bytes)

    if w_bytes <= _RESIDENT_WEIGHT_MAX_BYTES:
        # Weight-resident: 1-D grid over M; constant-index weight/bias blocks
        # are DMA'd once and stay in VMEM; x streams through exactly once.
        tm = _pick_tile(M, 512, (16, 8))
        est = 2 * w_bytes + 2 * tm * D * 2 + 2 * tm * N * out_isz + 2 * N * 4
        return pl.pallas_call(
            _proj_direct_kernel,
            out_shape=jax.ShapeDtypeStruct((M, N), out_dtype),
            grid_spec=pltpu.PrefetchScalarGridSpec(
                num_scalar_prefetch=0,
                grid=(M // tm,),
                in_specs=[
                    pl.BlockSpec((tm, D), lambda i: (i, 0)),
                    pl.BlockSpec((D, N), lambda i: (0, 0)),    # resident W.T
                    pl.BlockSpec((1, N), lambda i: (0, 0)),    # resident bias
                ],
                out_specs=pl.BlockSpec((tm, N), lambda i: (i, 0)),
            ),
            compiler_params=pltpu.CompilerParams(
                dimension_semantics=("parallel",),             # megacore on v7x
                vmem_limit_bytes=_vmem_limit(est)),
            cost_estimate=cost,
        )(x_flat, w_t, bias2d)

    # Large weight (dims > 2048): K-tiled reduction.  256-aligned tn/tk feed
    # the 2x256 MXU on v6e/v7x; the 128 fallback is native for v5e's 4x128.
    tm = _pick_tile(M, 512, (16, 8))
    tn = _pick_tile(N, 512, (256, 128))
    tk = _pick_tile(D, 2048, (256, 128))

    if tk == D:
        # Single K step: drop the reduction axis and the accumulator scratch.
        est = 2 * (tm * tk * 2 + tk * tn * 2 + tn * 4 + tm * tn * out_isz)
        return pl.pallas_call(
            _proj_direct_kernel,
            out_shape=jax.ShapeDtypeStruct((M, N), out_dtype),
            grid_spec=pltpu.PrefetchScalarGridSpec(
                num_scalar_prefetch=0,
                grid=(M // tm, N // tn),
                in_specs=[
                    pl.BlockSpec((tm, tk), lambda i, j: (i, 0)),
                    pl.BlockSpec((tk, tn), lambda i, j: (0, j)),
                    pl.BlockSpec((1, tn), lambda i, j: (0, j)),
                ],
                out_specs=pl.BlockSpec((tm, tn), lambda i, j: (i, j)),
            ),
            compiler_params=pltpu.CompilerParams(
                dimension_semantics=("parallel", "parallel"),
                vmem_limit_bytes=_vmem_limit(est)),
            cost_estimate=cost,
        )(x_flat, w_t, bias2d)

    est = (2 * (tm * tk * 2 + tk * tn * 2 + tn * 4 + tm * tn * out_isz)
           + tm * tn * 4)
    return pl.pallas_call(
        _proj_acc_kernel,
        out_shape=jax.ShapeDtypeStruct((M, N), out_dtype),
        grid_spec=pltpu.PrefetchScalarGridSpec(
            num_scalar_prefetch=0,
            grid=(M // tm, N // tn, D // tk),
            in_specs=[
                pl.BlockSpec((tm, tk), lambda i, j, k: (i, k)),
                pl.BlockSpec((tk, tn), lambda i, j, k: (k, j)),
                pl.BlockSpec((1, tn), lambda i, j, k: (0, j)),
            ],
            out_specs=pl.BlockSpec((tm, tn), lambda i, j, k: (i, j)),
            scratch_shapes=[pltpu.VMEM((tm, tn), jnp.float32)],
        ),
        compiler_params=pltpu.CompilerParams(
            dimension_semantics=("parallel", "parallel", "arbitrary"),
            vmem_limit_bytes=_vmem_limit(est)),
        cost_estimate=cost,
    )(x_flat, w_t, bias2d)


def value_projection_heads(x, w_t, bias2d, heads, head_dim, out_dtype):
    """Fused projection + head split: returns [B, H, S, Hd] directly.
    Requires head_dim % 128 == 0 (lane-dense stores) and a resident W.T."""
    B, S, D = x.shape
    _, N = w_t.shape
    out_isz = jnp.dtype(out_dtype).itemsize
    ts = _pick_tile(S, 512, (16, 8))
    w_bytes = D * N * w_t.dtype.itemsize
    est = 2 * w_bytes + 2 * ts * D * 2 + 2 * ts * N * out_isz + 2 * N * 4
    cost = pl.CostEstimate(
        flops=2 * B * S * D * N, transcendentals=0,
        bytes_accessed=x.size * 2 + w_bytes + N * 4 + B * S * N * out_isz)
    return pl.pallas_call(
        _make_heads_kernel(heads, head_dim),
        out_shape=jax.ShapeDtypeStruct((B, heads, S, head_dim), out_dtype),
        grid_spec=pltpu.PrefetchScalarGridSpec(
            num_scalar_prefetch=0,
            grid=(B, S // ts),
            in_specs=[
                pl.BlockSpec((1, ts, D), lambda b, s: (b, s, 0)),
                pl.BlockSpec((D, N), lambda b, s: (0, 0)),     # resident W.T
                pl.BlockSpec((1, N), lambda b, s: (0, 0)),     # resident bias
            ],
            out_specs=pl.BlockSpec((1, heads, ts, head_dim),
                                   lambda b, s: (b, 0, s, 0)),
        ),
        compiler_params=pltpu.CompilerParams(
            dimension_semantics=("parallel", "parallel"),
            vmem_limit_bytes=_vmem_limit(est)),
        cost_estimate=cost,
    )(x, w_t, bias2d)


# ----------------------------- module wrapper ----------------------------- #

class ValueModuleJAX:
    """JAX/Pallas port of the PyTorch ValueModule."""

    def __init__(self, dims: int, heads: int, key, out_dtype=jnp.bfloat16):
        assert dims % heads == 0, f"dims ({dims}) must be divisible by heads ({heads})"
        self.dims = dims
        self.heads = heads
        self.head_dim = dims // heads
        # Matches nn.init.normal_(std=0.02) weight [out, in] and zero bias.
        self.weight = 0.02 * jax.random.normal(key, (dims, dims), jnp.float32)
        self.bias = jnp.zeros((dims,), jnp.float32)
        # Hoisted out of __call__: pre-transposed bf16 weight (MXU native,
        # half the HBM/VMEM traffic, no per-call transpose) and 2-D f32 bias.
        # bf16 operands are a deliberate precision choice (f32 accumulation).
        self.weight_t = self.weight.T.astype(jnp.bfloat16)
        self.bias2d = self.bias.reshape(1, dims).astype(jnp.float32)
        # bf16 output halves output HBM write traffic; pass jnp.float32 to
        # match the PyTorch module's output dtype exactly.
        self.out_dtype = out_dtype

    def __call__(self, x):
        # x: [batch, seq, dims]
        B, S, D = x.shape
        assert D == self.dims
        H, Hd = self.heads, self.head_dim
        xc = x.astype(jnp.bfloat16)
        w_bytes = D * D * 2

        if (Hd % 128 == 0 and D <= _FUSED_MAX_DIMS
                and w_bytes <= _RESIDENT_WEIGHT_MAX_BYTES):
            # Kernel writes [B, H, S, Hd] directly: no post-kernel permute.
            return value_projection_heads(xc, self.weight_t, self.bias2d,
                                          H, Hd, self.out_dtype)

        # Flat [M, N] GEMM; the head split / permute is pure layout glue.
        M = B * S
        x_flat = xc.reshape(M, D)
        m_pad = (-M) % 16                 # bf16 packs 16 rows per sublane group
        if m_pad:
            x_flat = jnp.pad(x_flat, ((0, m_pad), (0, 0)))
        v_flat = value_projection_flat(x_flat, self.weight_t, self.bias2d,
                                       self.out_dtype)
        if m_pad:
            v_flat = v_flat[:M]
        v = v_flat.reshape(B, S, H, Hd)
        # TODO(synk): for head_dim < 128 the [B,H,S,Hd] permute stays in XLA;
        # downstream attention kernels that accept [B,S,H,Hd] can skip it.
        return jnp.transpose(v, (0, 2, 1, 3))


def _reference(x, weight, bias, heads):
    B, S, D = x.shape
    y = x.reshape(B * S, D) @ weight.T + bias
    return y.reshape(B, S, heads, D // heads).transpose(0, 2, 1, 3)


if __name__ == "__main__":
    key = jax.random.PRNGKey(0)
    k_w1, k_x1, k_w2, k_x2 = jax.random.split(key, 4)

    # Case 1: small spec shape (head_dim < 128 -> flat resident-weight path).
    batch, seq, dims, heads = 2, 8, 32, 4
    mod1 = ValueModuleJAX(dims, heads, k_w1)
    x1 = jax.random.normal(k_x1, (batch, seq, dims), jnp.float32)
    v1 = jax.block_until_ready(mod1(x1))
    ref1 = _reference(x1, mod1.weight, mod1.bias, heads)
    assert v1.shape == (batch, heads, seq, dims // heads)
    assert jnp.allclose(v1.astype(jnp.float32), ref1, atol=2e-2, rtol=2e-2), \
        float(jnp.max(jnp.abs(v1.astype(jnp.float32) - ref1)))

    # Case 2: head_dim == 128 -> fused [B, H, S, Hd] output path.
    batch2, seq2, dims2, heads2 = 2, 16, 256, 2
    mod2 = ValueModuleJAX(dims2, heads2, k_w2)
    x2 = jax.random.normal(k_x2, (batch2, seq2, dims2), jnp.float32)
    v2 = jax.block_until_ready(mod2(x2))
    ref2 = _reference(x2, mod2.weight, mod2.bias, heads2)
    assert v2.shape == (batch2, heads2, seq2, dims2 // heads2)
    assert jnp.allclose(v2.astype(jnp.float32), ref2, atol=2e-2, rtol=2e-2), \
        float(jnp.max(jnp.abs(v2.astype(jnp.float32) - ref2)))

    print("KERNEL_OK")
</pallas_src>

<mosaic_0001>
module attributes {stable_mosaic.version = 11 : i64} {
  func.func @_proj_direct_kernel(%arg0: i32, %arg1: memref<16x32xbf16, #tpu.memory_space<vmem>>, %arg2: memref<32x32xbf16, #tpu.memory_space<vmem>>, %arg3: memref<1x32xf32, #tpu.memory_space<vmem>>, %arg4: memref<16x32xbf16, #tpu.memory_space<vmem>>) attributes {dimension_semantics = [#tpu.dimension_semantics<parallel>], iteration_bounds = array<i64: 1>, scalar_prefetch = 0 : i64, scratch_operands = 0 : i64, tpu.core_type = #tpu.core_type<tc>, window_params = [{transform_indices = @transform_0, window_bounds = array<i64: 16, 32>}, {pipeline_mode = #tpu.pipeline_mode<synchronous>, transform_indices = @transform_1, window_bounds = array<i64: 32, 32>}, {pipeline_mode = #tpu.pipeline_mode<synchronous>, transform_indices = @transform_2, window_bounds = array<i64: 1, 32>}, {transform_indices = @transform_3, window_bounds = array<i64: 16, 32>}]} {
    %c0 = arith.constant 0 : index
    %c0_0 = arith.constant 0 : index
    %0 = vector.load %arg1[%c0, %c0_0] : memref<16x32xbf16, #tpu.memory_space<vmem>>, vector<16x32xbf16>
    %c0_1 = arith.constant 0 : index
    %c0_2 = arith.constant 0 : index
    %1 = vector.load %arg2[%c0_1, %c0_2] : memref<32x32xbf16, #tpu.memory_space<vmem>>, vector<32x32xbf16>
    %cst = arith.constant dense<0.000000e+00> : vector<16x32xf32>
    %2 = tpu.matmul %0, %1, %cst {dimension_numbers = #tpu.dot_dimension_numbers<[1], [0], [0], [1], [0, 0, 1, 1], [], []>} : vector<16x32xbf16>, vector<32x32xbf16>, vector<16x32xf32> -> vector<16x32xf32>
    %c0_3 = arith.constant 0 : index
    %c0_4 = arith.constant 0 : index
    %3 = vector.load %arg3[%c0_3, %c0_4] : memref<1x32xf32, #tpu.memory_space<vmem>>, vector<1x32xf32>
    %4 = vector.broadcast %3 : vector<1x32xf32> to vector<16x32xf32>
    %5 = arith.addf %2, %4 : vector<16x32xf32>
    %6 = arith.truncf %5 : vector<16x32xf32> to vector<16x32xbf16>
    %c0_5 = arith.constant 0 : index
    %c0_6 = arith.constant 0 : index
    %7 = vector.load %arg4[%c0_5, %c0_6] : memref<16x32xbf16, #tpu.memory_space<vmem>>, vector<16x32xbf16>
    tpu.vector_store %arg4[%c0_5, %c0_6], %6 {strides = array<i32>} : memref<16x32xbf16, #tpu.memory_space<vmem>>, vector<16x32xbf16>,
    return
  }
  func.func @transform_0(%arg0: i32) -> (i32, i32) {
    %c0_i32 = arith.constant 0 : i32
    %c0_i32_0 = arith.constant 0 : i32
    return %arg0, %c0_i32 : i32, i32
  }
  func.func @transform_1(%arg0: i32) -> (i32, i32) {
    %c0_i32 = arith.constant 0 : i32
    %c0_i32_0 = arith.constant 0 : i32
    %c0_i32_1 = arith.constant 0 : i32
    return %c0_i32, %c0_i32_0 : i32, i32
  }
  func.func @transform_2(%arg0: i32) -> (i32, i32) {
    %c0_i32 = arith.constant 0 : i32
    %c0_i32_0 = arith.constant 0 : i32
    %c0_i32_1 = arith.constant 0 : i32
    return %c0_i32, %c0_i32_0 : i32, i32
  }
  func.func @transform_3(%arg0: i32) -> (i32, i32) {
    %c0_i32 = arith.constant 0 : i32
    %c0_i32_0 = arith.constant 0 : i32
    return %arg0, %c0_i32 : i32, i32
  }
}

</mosaic_0001>

<llo_original>
// kernel: tpu_custom_call.1
$region0: #{tpu_custom_call.1}
  #allocation0 [shape = 'u32[]', space=smem, size = 0x4, offset = 0x4, fixed_abs, tag = 'smem constant byte address 0x4 - core index']
  #allocation1 [shape = 'u32[144,128]{1,0:T(1,128)}', space=vmem, size = 0x12000, scoped, tag = 'internal scratch']
  %s0 = inlined_call_operand.hbm [shape: bf16[16,32], index: 0, kind: input, shape index: {}]
  %s1 = inlined_call_operand.hbm [shape: bf16[32,32], index: 1, kind: input, shape index: {}]
  %s2 = inlined_call_operand.vmem [shape: f32[1,32], index: 2, kind: input, shape index: {}]
  %s3 = inlined_call_operand.hbm [shape: bf16[16,32], index: 3, kind: output, shape index: {}]
  %s4 = sld [smem:[#allocation0]]
  $region30: #{tpu_custom_call.1} parent=0
    _
  %s6 = ssub.s32 1, %s4
  %s7 = scalar_select 0, %s6, %s4
  $region1: #{tpu_custom_call.1} parent=0
    #allocation2 [shape = 'u8[4096]{0}', space=vmem, size = 0x1000, scoped, tag = 'input window, operand 0, single buffered']
    #allocation3 [shape = 's32[1]{0}', space=sflag, size = 0x4, scoped, tag = 'scoped memory for tpu_custom_call.1']
    #allocation4 [shape = 's32[1]{0}', space=sflag, size = 0x4, scoped, tag = 'scoped memory for tpu_custom_call.1']
    #allocation5 [shape = 'u8[8192]{0}', space=vmem, size = 0x2000, scoped, tag = 'input window, operand 1, single buffered']
    #allocation6 [shape = 's32[1]{0}', space=sflag, size = 0x4, scoped, tag = 'scoped memory for tpu_custom_call.1']
    #allocation7 [shape = 'u8[4096]{0}', space=vmem, size = 0x1000, scoped, tag = 'output window, operand 0, single buffered']
    %8 = vsyncpa [#allocation3], 0
    %9 = vsyncpa [#allocation6], 0
    %10 = vsyncpa [#allocation4], 0
    // Predicated region
    $region2: #{tpu_custom_call.1} parent=1 // pred_check
      _
    $region3: #{tpu_custom_call.1} parent=1 // pred_check_branch
      %12 = sbr.rel (0) target = $region5
    $region4: #{tpu_custom_call.1} parent=1 // pred_region
      %s14 = ssub.s32 128, 128
      %15 = vsyncadd [#allocation3], %s14
      %s16 = sshll.u32 [#allocation2], 4
      %s17 = int_to_ptr.vmem [resolvable:$true] %s16
      %22 = dma.hbm_to_vmem [thread:$0]  %s0, 128, %s17, [#allocation3], 64, 64, 4
    $region5: #{tpu_custom_call.1} parent=1 // pred_fallthru
      _
    // Predicated region
    $region6: #{tpu_custom_call.1} parent=1 // pred_check
      _
    $region7: #{tpu_custom_call.1} parent=1 // pred_check_branch
      %24 = sbr.rel (0) target = $region9
    $region8: #{tpu_custom_call.1} parent=1 // pred_region
      %s26 = ssub.s32 256, 256
      %27 = vsyncadd [#allocation6], %s26
      %s28 = sshll.u32 [#allocation5], 4
      %s29 = int_to_ptr.vmem [resolvable:$true] %s28
      %34 = dma.hbm_to_vmem [thread:$0]  %s1, 256, %s29, [#allocation6], 64, 64, 4
    $region9: #{tpu_custom_call.1} parent=1 // pred_fallthru
      _
    // Predicated region
    $region10: #{tpu_custom_call.1} parent=1 // pred_check
      _
    $region11: #{tpu_custom_call.1} parent=1 // pred_check_branch
      %36 = sbr.rel (0) target = $region13
    $region12: #{tpu_custom_call.1} parent=1 // pred_region
      _
    $region13: #{tpu_custom_call.1} parent=1 // pred_fallthru
      _
    // Predicated region
    $region14: #{tpu_custom_call.1} parent=1 // pred_check
      _
    $region15: #{tpu_custom_call.1} parent=1 // pred_check_branch
      %38 = sbr.rel (0) target = $region17
    $region16: #{tpu_custom_call.1} parent=1 // pred_region
      %39 = dma.done [#allocation3], 128
    $region17: #{tpu_custom_call.1} parent=1 // pred_fallthru
      _
    // Predicated region
    $region18: #{tpu_custom_call.1} parent=1 // pred_check
      _
    $region19: #{tpu_custom_call.1} parent=1 // pred_check_branch
      %41 = sbr.rel (0) target = $region21
    $region20: #{tpu_custom_call.1} parent=1 // pred_region
      %42 = dma.done [#allocation6], 256
    $region21: #{tpu_custom_call.1} parent=1 // pred_fallthru
      _
    %v44 = vld [vmem:[#allocation2] sm:$0xf]
    %v45 = vld [vmem:[#allocation2 + $0x4] sm:$0xf]
    %v46 = vld [vmem:[#allocation5] sm:$0xf]
    %v47 = vld [vmem:[#allocation5 + $0x4] sm:$0xf]
    %v48 = vld [vmem:[#allocation5 + $0x8] sm:$0xf]
    %v49 = vld [vmem:[#allocation5 + $0xc] sm:$0xf]
    %v50 = vld [vmem:[%s2] sm:$0x1]
    %v52 = vlaneseq
    %v53 = vshrl.u32 %v52, 7
    %v54 = vsub.s32 0, %v53
    %v55 = vrot.slane %v50, %v54
    %v59 = vunpack.c.l.b16 %v44
    %v60 = vunpack.c.l.b16 %v45
    %v61 = vpack.c.b16 %v60, %v59
    %v66 = vunpack.c.l.b16 %v46
    %v67 = vunpack.c.l.b16 %v47
    %v68 = vunpack.c.l.b16 %v48
    %v69 = vunpack.c.l.b16 %v49
    %v70 = vpack.c.b16 %v67, %v66
    %v71 = vpack.c.b16 %v69, %v68
    %vm74 = vcmask 261120
    %v76 = vsel %vm74, %v61, 0
    %78 = vmatprep.subr.bf16.mxu0 0
    %79 = vmatpush1.bf16.msra.mxu0 0
    %80 = vmatprep.subr.bf16.mxu0 0
    %81 = vmatpush1.bf16.msra.mxu0 0
    %82 = vmatprep.subr.bf16.mxu0 0
    %83 = vmatpush1.bf16.msra.mxu0 0
    %84 = vmatprep.subr.bf16.mxu0 0
    %85 = vmatpush1.bf16.msra.mxu0 0
    %86 = vmatprep.subr.bf16.mxu0 0
    %87 = vmatpush1.bf16.msra.mxu0 0
    %88 = vmatprep.subr.bf16.mxu0 0
    %89 = vmatpush1.bf16.msra.mxu0 0
    %90 = vmatprep.subr.bf16.mxu0 0
    %91 = vmatpush1.bf16.msra.mxu0 %v71
    %92 = vmatprep.subr.bf16.mxu0 0
    %93 = vmatpush1.bf16.msra.mxu0 %v70
    %94 = vmatprep.subr.bf16.mxu0 0
    %95 = vmatpush2.bf16.msra.mxu0 0
    %96 = vmatprep.subr.bf16.mxu0 0
    %97 = vmatpush2.bf16.msra.mxu0 0
    %98 = vmatprep.subr.bf16.mxu0 0
    %99 = vmatpush2.bf16.msra.mxu0 0
    %100 = vmatprep.subr.bf16.mxu0 0
    %101 = vmatpush2.bf16.msra.mxu0 0
    %102 = vmatprep.subr.bf16.mxu0 0
    %103 = vmatpush2.bf16.msra.mxu0 0
    %104 = vmatprep.subr.bf16.mxu0 0
    %105 = vmatpush2.bf16.msra.mxu0 0
    %106 = vmatprep.subr.bf16.mxu0 0
    %107 = vmatpush2.bf16.msra.mxu0 0
    %108 = vmatprep.subr.bf16.mxu0 0
    %109 = vmatpush2.bf16.msra.mxu0 0
    %110 = vmatprep.mubr.bf16.mxu0 0
    %111 = vmatmul.mubr.bf16.gmra.mxu0 %v76
    %v112 = vpop.f32.mrf.mxu0
    %v113 = vadd.f32 %v55, %v112
    %v114 = vpop.f32.mrf.mxu0
    %v115 = vpop.f32.mrf.mxu0
    %v116 = vadd.f32 %v55, %v115
    %v117 = vpop.f32.mrf.mxu0
    %118 = vdwg.mxu0
    %v119 = vpack.c.bf16 %v116, %v113
    %v121 = vunpack.c.l.b16 %v119
    %v122 = vunpack.c.h.b16 %v119
    %v123 = vpack.c.b16 %v121, %v121
    %v124 = vpack.c.b16 %v122, %v122
    %vm127 = vcmask 257024
    %128 = vst.msk [vmem:[#allocation7] sm:$0xf] %vm127, %v123
    %129 = vst.msk [vmem:[#allocation7 + $0x4] sm:$0xf] %vm127, %v124
    // Predicated region
    $region22: #{tpu_custom_call.1} parent=1 // pred_check
      _
    $region23: #{tpu_custom_call.1} parent=1 // pred_check_branch
      %131 = sbr.rel (0) target = $region25
    $region24: #{tpu_custom_call.1} parent=1 // pred_region
      %s133 = ssub.s32 128, 128
      %134 = vsyncadd [#allocation4], %s133
      %s135 = sshll.u32 [#allocation7], 4
      %s136 = int_to_ptr.vmem [resolvable:$true] %s135
      %141 = dma.vmem_to_hbm [thread:$0]  %s136, 128, %s3, [#allocation4], 64, 64, 4
    $region25: #{tpu_custom_call.1} parent=1 // pred_fallthru
      _
    // Predicated region
    $region26: #{tpu_custom_call.1} parent=1 // pred_check
      _
    $region27: #{tpu_custom_call.1} parent=1 // pred_check_branch
      %143 = sbr.rel (0) target = $region29
    $region28: #{tpu_custom_call.1} parent=1 // pred_region
      %144 = dma.done [#allocation4], 128
    $region29: #{tpu_custom_call.1} parent=1 // pred_fallthru
      _
    %145 = vsyncpa [#allocation3], 1
    %146 = vsyncpa [#allocation6], 1
    %147 = vsyncpa [#allocation4], 1

</llo_original>
